<compile_context>
chip_gen: v5e
topology: v5e:2x2
jax: 0.10.0
libtpu: 0.0.40
codegen_flags: <defaults>
</compile_context>

<pallas_src>
import jax
import jax.numpy as jnp
from jax.experimental import pallas as pl
from jax.experimental.pallas import tpu as pltpu

IN_DIM = 40        # np.prod((1, 1, 40))
HIDDEN = 512       # Encoder_AE_MLP hidden layer
LATENT = 40        # outdim_size_dcca / latent_dim


def _round_up(x, m):
    return ((x + m - 1) // m) * m


def _encoder_lcca_kernel(x_ref, w1_ref, b1_ref, w2p_ref, bp_ref, o_ref):
    # x_ref:   (TB, IN_DIM) f32      w1_ref:  (IN_DIM, HIDDEN) bf16
    # b1_ref:  (1, HIDDEN)  f32      w2p_ref: (HIDDEN, LATENT) bf16   (w2 @ w, pre-folded)
    # bp_ref:  (1, LATENT)  f32      o_ref:   (TB, LATENT) f32
    x = x_ref[...].astype(jnp.bfloat16)

    # Linear(40, 512) + ReLU  (bf16 MXU operands, f32 accumulate + f32 elementwise)
    h = jnp.dot(x, w1_ref[...], preferred_element_type=jnp.float32) + b1_ref[...]
    h = jnp.maximum(h, 0.0)

    # Fused Linear(512, 40) + linear-CCA projection (already folded into w2p / bp)
    o_ref[...] = (
        jnp.dot(h.astype(jnp.bfloat16), w2p_ref[...], preferred_element_type=jnp.float32)
        + bp_ref[...]
    )


def prepare_params(params):
    """One-time fold of the linear-CCA projection into the 2nd Linear, plus bf16 casts.

    Call once outside the per-step forward so these tiny ops (512x40x40 matmul, casts)
    are not re-launched on every invocation.
    """
    w1, b1, w2, b2, m, w = params
    w2p = w2 @ w                                   # (HIDDEN, LATENT), exact f32 fold
    bp = (b2 - m) @ w                              # (1, LATENT)
    return (
        w1.astype(jnp.bfloat16),                   # (IN_DIM, HIDDEN)
        b1.astype(jnp.float32).reshape(1, HIDDEN),
        w2p.astype(jnp.bfloat16),                  # (HIDDEN, LATENT)
        bp.astype(jnp.float32).reshape(1, LATENT),
    )


def wrapper_encoder_lcca_attributes_fwd(x, prepared, *, tb=4096):
    """x: (B, 1, 1, 40) float32 (NCHW attributes).  Returns embedding (B, 40) float32."""
    B = x.shape[0]
    x2d = x.reshape(B, IN_DIM).astype(jnp.float32)   # same as .reshape(-1, prod(input_dim))
    w1_bf, b1_f32, w2p_bf, bp_f32 = prepared

    # --- batch tile selection (no padded HBM copy of x) ---
    tb = _round_up(max(tb, 8), 8)
    # keep >= 2 grid steps when possible so "parallel" can use both v7x TensorCores
    split = _round_up(max(pl.cdiv(_round_up(B, 8), 2), 8), 8)
    # min of {mult-of-8, mult-of-8, B}: either a multiple of 8 or the full batch dim -> legal
    TB = min(tb, split, B)
    grid = (pl.cdiv(B, TB),)   # partial trailing block: reads are per-row, writes are masked

    cost = pl.CostEstimate(
        flops=2 * B * IN_DIM * HIDDEN + 2 * B * HIDDEN * LATENT,
        transcendentals=0,
        bytes_accessed=(B * IN_DIM * 4 + B * LATENT * 4
                        + w1_bf.size * 2 + w2p_bf.size * 2
                        + b1_f32.size * 4 + bp_f32.size * 4),
    )

    # VMEM budget: double-buffered x/out tiles + resident weights + f32 and bf16 hidden acts.
    vmem_est = (2 * TB * (IN_DIM + LATENT) * 4
                + w1_bf.size * 2 + w2p_bf.size * 2 + b1_f32.size * 4 + bp_f32.size * 4
                + TB * HIDDEN * (4 + 2))
    # >= 32 MiB default, capped at v7x's 64 MiB physical VMEM (only hit if tb is hand-raised).
    vmem_limit = min(max(32 << 20, (vmem_est * 3) // 2), 64 << 20)

    out = pl.pallas_call(
        _encoder_lcca_kernel,
        out_shape=jax.ShapeDtypeStruct((B, LATENT), jnp.float32),
        grid=grid,
        in_specs=[
            pl.BlockSpec((TB, IN_DIM), lambda i: (i, 0)),        # x: tiled over batch
            pl.BlockSpec((IN_DIM, HIDDEN), lambda i: (0, 0)),    # w1: VMEM-resident
            pl.BlockSpec((1, HIDDEN), lambda i: (0, 0)),         # b1: VMEM-resident
            pl.BlockSpec((HIDDEN, LATENT), lambda i: (0, 0)),    # folded w2p: VMEM-resident
            pl.BlockSpec((1, LATENT), lambda i: (0, 0)),         # folded bp: VMEM-resident
        ],
        out_specs=pl.BlockSpec((TB, LATENT), lambda i: (i, 0)),  # lane dim == full 40
        compiler_params=pltpu.CompilerParams(
            dimension_semantics=("parallel",),
            vmem_limit_bytes=vmem_limit),
        cost_estimate=cost,
    )(x2d, w1_bf, b1_f32, w2p_bf, bp_f32)

    return out


def init_params(key):
    """Deterministic synthetic parameters with the same shapes the module loads from disk."""
    k1, k2, k3, k4, k5, k6 = jax.random.split(key, 6)
    # PyTorch nn.Linear stores weight as (out, in); we keep the transposed
    # (in, out) layout for row-major matmul in the kernel.
    w1 = jax.random.normal(k1, (IN_DIM, HIDDEN), jnp.float32) * 0.05
    b1 = jax.random.normal(k2, (1, HIDDEN), jnp.float32) * 0.05
    w2 = jax.random.normal(k3, (HIDDEN, LATENT), jnp.float32) * 0.05
    b2 = jax.random.normal(k4, (1, LATENT), jnp.float32) * 0.05
    m = jax.random.normal(k5, (1, LATENT), jnp.float32) * 0.05       # l_cca_m[1]
    w = jax.random.normal(k6, (LATENT, LATENT), jnp.float32) * 0.05  # l_cca_w[1]
    return (w1, b1, w2, b2, m, w)


def _reference(x, params):
    """Pure-JAX f32 reference mirroring the PyTorch/numpy forward (unfused)."""
    w1, b1, w2, b2, m, w = params
    B = x.shape[0]
    h = jnp.maximum(x.reshape(B, IN_DIM) @ w1 + b1, 0.0)
    e = h @ w2 + b2
    return (e - m) @ w


if __name__ == "__main__":
    key = jax.random.PRNGKey(0)
    kp, kx, kx2, kx3 = jax.random.split(key, 4)
    params = init_params(kp)
    prepared = prepare_params(params)   # one-time CCA fold + bf16 casts (hoisted)

    # TODO(synk): weights/CCA stats come from files (model2.pt, l_cca_*.npy) in the original
    # module; synthesized deterministically here since no file I/O is allowed.

    # module input: attributes tensor of shape (B, 1, 1, 40)
    B = 2
    x = jax.random.normal(kx, (B, 1, 1, IN_DIM), jnp.float32)
    out = jax.block_until_ready(wrapper_encoder_lcca_attributes_fwd(x, prepared))
    ref = _reference(x, params)
    assert out.shape == (B, LATENT) and out.dtype == jnp.float32
    # bf16 MXU operands with f32 accumulation -> relaxed tolerance
    assert jnp.allclose(out, ref, atol=5e-2, rtol=5e-2)

    # ragged batch + multi-tile grid with a partial trailing block (no padding copy)
    B2 = 37
    x2 = jax.random.normal(kx2, (B2, 1, 1, IN_DIM), jnp.float32)
    out2 = jax.block_until_ready(wrapper_encoder_lcca_attributes_fwd(x2, prepared, tb=8))
    ref2 = _reference(x2, params)
    assert out2.shape == (B2, LATENT)
    assert jnp.allclose(out2, ref2, atol=5e-2, rtol=5e-2)

    # default tile path: TB capped so grid has >= 2 steps (v7x megacore sharding)
    B3 = 100
    x3 = jax.random.normal(kx3, (B3, 1, 1, IN_DIM), jnp.float32)
    out3 = jax.block_until_ready(wrapper_encoder_lcca_attributes_fwd(x3, prepared))
    ref3 = _reference(x3, params)
    assert out3.shape == (B3, LATENT)
    assert jnp.allclose(out3, ref3, atol=5e-2, rtol=5e-2)

    print("KERNEL_OK")
</pallas_src>

<mosaic_0001>
module attributes {stable_mosaic.version = 11 : i64} {
  func.func @_encoder_lcca_kernel(%arg0: i32, %arg1: memref<2x40xf32, #tpu.memory_space<vmem>>, %arg2: memref<40x512xbf16, #tpu.memory_space<vmem>>, %arg3: memref<1x512xf32, #tpu.memory_space<vmem>>, %arg4: memref<512x40xbf16, #tpu.memory_space<vmem>>, %arg5: memref<1x40xf32, #tpu.memory_space<vmem>>, %arg6: memref<2x40xf32, #tpu.memory_space<vmem>>) attributes {dimension_semantics = [#tpu.dimension_semantics<parallel>], iteration_bounds = array<i64: 1>, scalar_prefetch = 0 : i64, scratch_operands = 0 : i64, tpu.core_type = #tpu.core_type<tc>, window_params = [{transform_indices = @transform_0, window_bounds = array<i64: 2, 40>}, {pipeline_mode = #tpu.pipeline_mode<synchronous>, transform_indices = @transform_1, window_bounds = array<i64: 40, 512>}, {pipeline_mode = #tpu.pipeline_mode<synchronous>, transform_indices = @transform_2, window_bounds = array<i64: 1, 512>}, {pipeline_mode = #tpu.pipeline_mode<synchronous>, transform_indices = @transform_3, window_bounds = array<i64: 512, 40>}, {pipeline_mode = #tpu.pipeline_mode<synchronous>, transform_indices = @transform_4, window_bounds = array<i64: 1, 40>}, {transform_indices = @transform_5, window_bounds = array<i64: 2, 40>}]} {
    %c0 = arith.constant 0 : index
    %c0_0 = arith.constant 0 : index
    %0 = vector.load %arg1[%c0, %c0_0] : memref<2x40xf32, #tpu.memory_space<vmem>>, vector<2x40xf32>
    %1 = arith.truncf %0 : vector<2x40xf32> to vector<2x40xbf16>
    %c0_1 = arith.constant 0 : index
    %c0_2 = arith.constant 0 : index
    %2 = vector.load %arg2[%c0_1, %c0_2] : memref<40x512xbf16, #tpu.memory_space<vmem>>, vector<40x512xbf16>
    %cst = arith.constant dense<0.000000e+00> : vector<2x512xf32>
    %3 = tpu.matmul %1, %2, %cst {dimension_numbers = #tpu.dot_dimension_numbers<[1], [0], [0], [1], [0, 0, 1, 1], [], []>} : vector<2x40xbf16>, vector<40x512xbf16>, vector<2x512xf32> -> vector<2x512xf32>
    %c0_3 = arith.constant 0 : index
    %c0_4 = arith.constant 0 : index
    %4 = vector.load %arg3[%c0_3, %c0_4] : memref<1x512xf32, #tpu.memory_space<vmem>>, vector<1x512xf32>
    %5 = vector.broadcast %4 : vector<1x512xf32> to vector<2x512xf32>
    %6 = arith.addf %3, %5 : vector<2x512xf32>
    %cst_5 = arith.constant 0.000000e+00 : f32
    %7 = vector.broadcast %cst_5 : f32 to vector<2x512xf32>
    %8 = arith.maximumf %6, %7 : vector<2x512xf32>
    %9 = arith.truncf %8 : vector<2x512xf32> to vector<2x512xbf16>
    %c0_6 = arith.constant 0 : index
    %c0_7 = arith.constant 0 : index
    %10 = vector.load %arg4[%c0_6, %c0_7] : memref<512x40xbf16, #tpu.memory_space<vmem>>, vector<512x40xbf16>
    %cst_8 = arith.constant dense<0.000000e+00> : vector<2x40xf32>
    %11 = tpu.matmul %9, %10, %cst_8 {dimension_numbers = #tpu.dot_dimension_numbers<[1], [0], [0], [1], [0, 0, 1, 1], [], []>} : vector<2x512xbf16>, vector<512x40xbf16>, vector<2x40xf32> -> vector<2x40xf32>
    %c0_9 = arith.constant 0 : index
    %c0_10 = arith.constant 0 : index
    %12 = vector.load %arg5[%c0_9, %c0_10] : memref<1x40xf32, #tpu.memory_space<vmem>>, vector<1x40xf32>
    %13 = vector.broadcast %12 : vector<1x40xf32> to vector<2x40xf32>
    %14 = arith.addf %11, %13 : vector<2x40xf32>
    %c0_11 = arith.constant 0 : index
    %c0_12 = arith.constant 0 : index
    %15 = vector.load %arg6[%c0_11, %c0_12] : memref<2x40xf32, #tpu.memory_space<vmem>>, vector<2x40xf32>
    tpu.vector_store %arg6[%c0_11, %c0_12], %14 {strides = array<i32>} : memref<2x40xf32, #tpu.memory_space<vmem>>, vector<2x40xf32>,
    return
  }
  func.func @transform_0(%arg0: i32) -> (i32, i32) {
    %c0_i32 = arith.constant 0 : i32
    %c0_i32_0 = arith.constant 0 : i32
    return %arg0, %c0_i32 : i32, i32
  }
  func.func @transform_1(%arg0: i32) -> (i32, i32) {
    %c0_i32 = arith.constant 0 : i32
    %c0_i32_0 = arith.constant 0 : i32
    %c0_i32_1 = arith.constant 0 : i32
    return %c0_i32, %c0_i32_0 : i32, i32
  }
  func.func @transform_2(%arg0: i32) -> (i32, i32) {
    %c0_i32 = arith.constant 0 : i32
    %c0_i32_0 = arith.constant 0 : i32
    %c0_i32_1 = arith.constant 0 : i32
    return %c0_i32, %c0_i32_0 : i32, i32
  }
  func.func @transform_3(%arg0: i32) -> (i32, i32) {
    %c0_i32 = arith.constant 0 : i32
    %c0_i32_0 = arith.constant 0 : i32
    %c0_i32_1 = arith.constant 0 : i32
    return %c0_i32, %c0_i32_0 : i32, i32
  }
  func.func @transform_4(%arg0: i32) -> (i32, i32) {
    %c0_i32 = arith.constant 0 : i32
    %c0_i32_0 = arith.constant 0 : i32
    %c0_i32_1 = arith.constant 0 : i32
    return %c0_i32, %c0_i32_0 : i32, i32
  }
  func.func @transform_5(%arg0: i32) -> (i32, i32) {
    %c0_i32 = arith.constant 0 : i32
    %c0_i32_0 = arith.constant 0 : i32
    return %arg0, %c0_i32 : i32, i32
  }
}

</mosaic_0001>

<llo_original>
// kernel: tpu_custom_call.1
$region0: #{tpu_custom_call.1}
  #allocation0 [shape = 'u32[]', space=smem, size = 0x4, offset = 0x4, fixed_abs, tag = 'smem constant byte address 0x4 - core index']
  #allocation1 [shape = 'u32[72,128]{1,0:T(1,128)}', space=vmem, size = 0x9000, scoped, tag = 'internal scratch']
  %s0 = inlined_call_operand.vmem [shape: f32[2,40], index: 0, kind: input, shape index: {}]
  %s1 = inlined_call_operand.vmem [shape: bf16[40,512], index: 1, kind: input, shape index: {}]
  %s2 = inlined_call_operand.vmem [shape: f32[1,512], index: 2, kind: input, shape index: {}]
  %s3 = inlined_call_operand.vmem [shape: bf16[512,40], index: 3, kind: input, shape index: {}]
  %s4 = inlined_call_operand.vmem [shape: f32[1,40], index: 4, kind: input, shape index: {}]
  %s5 = inlined_call_operand.hbm [shape: f32[2,40], index: 5, kind: output, shape index: {}]
  %s6 = sld [smem:[#allocation0]]
  $region30: #{tpu_custom_call.1} parent=0
    _
  %s8 = ssub.s32 1, %s6
  %s9 = scalar_select 0, %s8, %s6
  $region1: #{tpu_custom_call.1} parent=0
    #allocation2 [shape = 'u8[1024]{0}', space=vmem, size = 0x400, scoped, tag = 'output window, operand 0, single buffered']
    #allocation3 [shape = 's32[1]{0}', space=sflag, size = 0x4, scoped, tag = 'scoped memory for tpu_custom_call.1']
    %10 = vsyncpa [#allocation3], 0
    // Predicated region
    $region2: #{tpu_custom_call.1} parent=1 // pred_check
      _
    $region3: #{tpu_custom_call.1} parent=1 // pred_check_branch
      %12 = sbr.rel (0) target = $region5
    $region4: #{tpu_custom_call.1} parent=1 // pred_region
      _
    $region5: #{tpu_custom_call.1} parent=1 // pred_fallthru
      _
    // Predicated region
    $region6: #{tpu_custom_call.1} parent=1 // pred_check
      _
    $region7: #{tpu_custom_call.1} parent=1 // pred_check_branch
      %14 = sbr.rel (0) target = $region9
    $region8: #{tpu_custom_call.1} parent=1 // pred_region
      _
    $region9: #{tpu_custom_call.1} parent=1 // pred_fallthru
      _
    // Predicated region
    $region10: #{tpu_custom_call.1} parent=1 // pred_check
      _
    $region11: #{tpu_custom_call.1} parent=1 // pred_check_branch
      %16 = sbr.rel (0) target = $region13
    $region12: #{tpu_custom_call.1} parent=1 // pred_region
      _
    $region13: #{tpu_custom_call.1} parent=1 // pred_fallthru
      _
    // Predicated region
    $region14: #{tpu_custom_call.1} parent=1 // pred_check
      _
    $region15: #{tpu_custom_call.1} parent=1 // pred_check_branch
      %18 = sbr.rel (0) target = $region17
    $region16: #{tpu_custom_call.1} parent=1 // pred_region
      _
    $region17: #{tpu_custom_call.1} parent=1 // pred_fallthru
      _
    // Predicated region
    $region18: #{tpu_custom_call.1} parent=1 // pred_check
      _
    $region19: #{tpu_custom_call.1} parent=1 // pred_check_branch
      %20 = sbr.rel (0) target = $region21
    $region20: #{tpu_custom_call.1} parent=1 // pred_region
      _
    $region21: #{tpu_custom_call.1} parent=1 // pred_fallthru
      _
    %v22 = vld [vmem:[%s0] sm:$0x3]
    %v23 = vpack.c.bf16 %v22, %v22
    %v24 = vld [vmem:[%s1] sm:$0xff]
    %v25 = vld [vmem:[%s1 + $0x8] sm:$0xff]
    %v26 = vld [vmem:[%s1 + $0x10] sm:$0xff]
    %v27 = vld [vmem:[%s1 + $0x18] sm:$0xff]
    %v28 = vld [vmem:[%s1 + $0x20] sm:$0xff]
    %v29 = vld [vmem:[%s1 + $0x28] sm:$0xff]
    %v30 = vld [vmem:[%s1 + $0x30] sm:$0xff]
    %v31 = vld [vmem:[%s1 + $0x38] sm:$0xff]
    %v32 = vld [vmem:[%s1 + $0x40] sm:$0xff]
    %v33 = vld [vmem:[%s1 + $0x48] sm:$0xff]
    %v34 = vld [vmem:[%s2] sm:$0xf]
    %v36 = vperm.slane %v34, 0
    %v37 = vperm.slane %v34, 1
    %v38 = vperm.slane %v34, 2
    %v39 = vperm.slane %v34, 3
    %v54 = vunpack.c.l.b16 %v24
    %v55 = vunpack.c.h.b16 %v24
    %v56 = vunpack.c.l.b16 %v25
    %v57 = vunpack.c.h.b16 %v25
    %v58 = vunpack.c.l.b16 %v26
    %v59 = vunpack.c.h.b16 %v26
    %v60 = vunpack.c.l.b16 %v27
    %v61 = vunpack.c.h.b16 %v27
    %v62 = vunpack.c.l.b16 %v28
    %v63 = vunpack.c.h.b16 %v28
    %v64 = vunpack.c.l.b16 %v29
    %v65 = vunpack.c.h.b16 %v29
    %v66 = vunpack.c.l.b16 %v30
    %v67 = vunpack.c.h.b16 %v30
    %v68 = vunpack.c.l.b16 %v31
    %v69 = vunpack.c.h.b16 %v31
    %v70 = vunpack.c.l.b16 %v32
    %v71 = vunpack.c.h.b16 %v32
    %v72 = vunpack.c.l.b16 %v33
    %v73 = vunpack.c.h.b16 %v33
    %v74 = vpack.c.b16 %v58, %v54
    %v75 = vpack.c.b16 %v59, %v55
    %v76 = vpack.c.b16 %v60, %v56
    %v77 = vpack.c.b16 %v61, %v57
    %v78 = vpack.c.b16 %v66, %v62
    %v79 = vpack.c.b16 %v67, %v63
    %v80 = vpack.c.b16 %v68, %v64
    %v81 = vpack.c.b16 %v69, %v65
    %v82 = vpack.c.b16 %v70, %v70
    %v83 = vpack.c.b16 %v71, %v71
    %v84 = vpack.c.b16 %v72, %v72
    %v85 = vpack.c.b16 %v73, %v73
    %vm94 = vcmask 326656
    %v96 = vsel %vm94, %v23, 0
    %vm98 = vcmask 1043456
    %v100 = vsel %vm98, %v82, 0
    %v103 = vsel %vm98, %v83, 0
    %v106 = vsel %vm98, %v84, 0
    %v109 = vsel %vm98, %v85, 0
    %111 = vmatpush.bf16.msra.mxu0 0
    %112 = vmatpush.bf16.msra.mxu0 0
    %113 = vmatpush.bf16.msra.mxu0 0
    %114 = vmatpush.bf16.msra.mxu0 0
    %115 = vmatpush.bf16.msra.mxu0 0
    %116 = vmatpush.bf16.msra.mxu0 %v100
    %117 = vmatpush.bf16.msra.mxu0 %v78
    %118 = vmatpush.bf16.msra.mxu0 %v74
    %119 = vmatmul.bf16.gmra.mxu0 %v96
    %v120 = vpop.f32.mrf.mxu0
    %v121 = vadd.f32 %v36, %v120
    %v122 = vpop.f32.mrf.mxu0
    %123 = vdwg.mxu0
    %124 = vmatpush.bf16.msra.mxu0 0
    %125 = vmatpush.bf16.msra.mxu0 0
    %126 = vmatpush.bf16.msra.mxu0 0
    %127 = vmatpush.bf16.msra.mxu0 0
    %128 = vmatpush.bf16.msra.mxu0 0
    %129 = vmatpush.bf16.msra.mxu0 %v103
    %130 = vmatpush.bf16.msra.mxu0 %v79
    %131 = vmatpush.bf16.msra.mxu0 %v75
    %132 = vmatmul.bf16.gmra.mxu0 %v96
    %v133 = vpop.f32.mrf.mxu0
    %v134 = vadd.f32 %v37, %v133
    %v135 = vpop.f32.mrf.mxu0
    %136 = vdwg.mxu0
    %137 = vmatpush.bf16.msra.mxu0 0
    %138 = vmatpush.bf16.msra.mxu0 0
    %139 = vmatpush.bf16.msra.mxu0 0
    %140 = vmatpush.bf16.msra.mxu0 0
    %141 = vmatpush.bf16.msra.mxu0 0
    %142 = vmatpush.bf16.msra.mxu0 %v106
    %143 = vmatpush.bf16.msra.mxu0 %v80
    %144 = vmatpush.bf16.msra.mxu0 %v76
    %145 = vmatmul.bf16.gmra.mxu0 %v96
    %v146 = vpop.f32.mrf.mxu0
    %v147 = vadd.f32 %v38, %v146
    %v148 = vpop.f32.mrf.mxu0
    %149 = vdwg.mxu0
    %150 = vmatpush.bf16.msra.mxu0 0
    %151 = vmatpush.bf16.msra.mxu0 0
    %152 = vmatpush.bf16.msra.mxu0 0
    %153 = vmatpush.bf16.msra.mxu0 0
    %154 = vmatpush.bf16.msra.mxu0 0
    %155 = vmatpush.bf16.msra.mxu0 %v109
    %156 = vmatpush.bf16.msra.mxu0 %v81
    %157 = vmatpush.bf16.msra.mxu0 %v77
    %158 = vmatmul.bf16.gmra.mxu0 %v96
    %v159 = vpop.f32.mrf.mxu0
    %v160 = vadd.f32 %v39, %v159
    %v161 = vpop.f32.mrf.mxu0
    %162 = vdwg.mxu0
    %v163 = vmax.f32 %v121, 0.0
    %v164 = vmax.f32 %v134, 0.0
    %v165 = vmax.f32 %v147, 0.0
    %v166 = vmax.f32 %v160, 0.0
    %v167 = vpack.c.bf16 %v163, %v163
    %v168 = vpack.c.bf16 %v164, %v164
    %v169 = vpack.c.bf16 %v165, %v165
    %v170 = vpack.c.bf16 %v166, %v166
    %v171 = vld [vmem:[%s3] sm:$0xf]
    %v172 = vld [vmem:[%s3 + $0x4] sm:$0xf]
    %v173 = vld [vmem:[%s3 + $0x8] sm:$0xf]
    %v174 = vld [vmem:[%s3 + $0xc] sm:$0xf]
    %v175 = vld [vmem:[%s3 + $0x10] sm:$0xf]
    %v176 = vld [vmem:[%s3 + $0x14] sm:$0xf]
    %v177 = vld [vmem:[%s3 + $0x18] sm:$0xf]
    %v178 = vld [vmem:[%s3 + $0x1c] sm:$0xf]
    %v179 = vld [vmem:[%s3 + $0x20] sm:$0xf]
    %v180 = vld [vmem:[%s3 + $0x24] sm:$0xf]
    %v181 = vld [vmem:[%s3 + $0x28] sm:$0xf]
    %v182 = vld [vmem:[%s3 + $0x2c] sm:$0xf]
    %v183 = vld [vmem:[%s3 + $0x30] sm:$0xf]
    %v184 = vld [vmem:[%s3 + $0x34] sm:$0xf]
    %v185 = vld [vmem:[%s3 + $0x38] sm:$0xf]
    %v186 = vld [vmem:[%s3 + $0x3c] sm:$0xf]
    %v187 = vld [vmem:[%s3 + $0x40] sm:$0xf]
    %v188 = vld [vmem:[%s3 + $0x44] sm:$0xf]
    %v189 = vld [vmem:[%s3 + $0x48] sm:$0xf]
    %v190 = vld [vmem:[%s3 + $0x4c] sm:$0xf]
    %v191 = vld [vmem:[%s3 + $0x50] sm:$0xf]
    %v192 = vld [vmem:[%s3 + $0x54] sm:$0xf]
    %v193 = vld [vmem:[%s3 + $0x58] sm:$0xf]
    %v194 = vld [vmem:[%s3 + $0x5c] sm:$0xf]
    %v195 = vld [vmem:[%s3 + $0x60] sm:$0xf]
    %v196 = vld [vmem:[%s3 + $0x64] sm:$0xf]
    %v197 = vld [vmem:[%s3 + $0x68] sm:$0xf]
    %v198 = vld [vmem:[%s3 + $0x6c] sm:$0xf]
    %v199 = vld [vmem:[%s3 + $0x70] sm:$0xf]
    %v200 = vld [vmem:[%s3 + $0x74] sm:$0xf]
    %v201 = vld [vmem:[%s3 + $0x78] sm:$0xf]
    %v202 = vld [vmem:[%s3 + $0x7c] sm:$0xf]
    %v203 = vld [vmem:[%s3 + $0x80] sm:$0xf]
    %v204 = vld [vmem:[%s3 + $0x84] sm:$0xf]
    %v205 = vld [vmem:[%s3 + $0x88] sm:$0xf]
    %v206 = vld [vmem:[%s3 + $0x8c] sm:$0xf]
    %v207 = vld [vmem:[%s3 + $0x90] sm:$0xf]
    %v208 = vld [vmem:[%s3 + $0x94] sm:$0xf]
    %v209 = vld [vmem:[%s3 + $0x98] sm:$0xf]
    %v210 = vld [vmem:[%s3 + $0x9c] sm:$0xf]
    %v211 = vld [vmem:[%s3 + $0xa0] sm:$0xf]
    %v212 = vld [vmem:[%s3 + $0xa4] sm:$0xf]
    %v213 = vld [vmem:[%s3 + $0xa8] sm:$0xf]
    %v214 = vld [vmem:[%s3 + $0xac] sm:$0xf]
    %v215 = vld [vmem:[%s3 + $0xb0] sm:$0xf]
    %v216 = vld [vmem:[%s3 + $0xb4] sm:$0xf]
    %v217 = vld [vmem:[%s3 + $0xb8] sm:$0xf]
    %v218 = vld [vmem:[%s3 + $0xbc] sm:$0xf]
    %v219 = vld [vmem:[%s3 + $0xc0] sm:$0xf]
    %v220 = vld [vmem:[%s3 + $0xc4] sm:$0xf]
    %v221 = vld [vmem:[%s3 + $0xc8] sm:$0xf]
    %v222 = vld [vmem:[%s3 + $0xcc] sm:$0xf]
    %v223 = vld [vmem:[%s3 + $0xd0] sm:$0xf]
    %v224 = vld [vmem:[%s3 + $0xd4] sm:$0xf]
    %v225 = vld [vmem:[%s3 + $0xd8] sm:$0xf]
    %v226 = vld [vmem:[%s3 + $0xdc] sm:$0xf]
    %v227 = vld [vmem:[%s3 + $0xe0] sm:$0xf]
    %v228 = vld [vmem:[%s3 + $0xe4] sm:$0xf]
    %v229 = vld [vmem:[%s3 + $0xe8] sm:$0xf]
    %v230 = vld [vmem:[%s3 + $0xec] sm:$0xf]
    %v231 = vld [vmem:[%s3 + $0xf0] sm:$0xf]
    %v232 = vld [vmem:[%s3 + $0xf4] sm:$0xf]
    %v233 = vld [vmem:[%s3 + $0xf8] sm:$0xf]
    %v234 = vld [vmem:[%s3 + $0xfc] sm:$0xf]
    %v235 = vld [vmem:[%s4] sm:$0x1]
    %v237 = vperm.slane %v235, 0
    %v303 = vunpack.c.l.b16 %v171
    %v304 = vunpack.c.l.b16 %v172
    %v305 = vunpack.c.l.b16 %v173
    %v306 = vunpack.c.l.b16 %v174
    %v307 = vunpack.c.l.b16 %v175
    %v308 = vunpack.c.l.b16 %v176
    %v309 = vunpack.c.l.b16 %v177
    %v310 = vunpack.c.l.b16 %v178
    %v311 = vunpack.c.l.b16 %v179
    %v312 = vunpack.c.l.b16 %v180
    %v313 = vunpack.c.l.b16 %v181
    %v314 = vunpack.c.l.b16 %v182
    %v315 = vunpack.c.l.b16 %v183
    %v316 = vunpack.c.l.b16 %v184
    %v317 = vunpack.c.l.b16 %v185
    %v318 = vunpack.c.l.b16 %v186
    %v319 = vunpack.c.l.b16 %v187
    %v320 = vunpack.c.l.b16 %v188
    %v321 = vunpack.c.l.b16 %v189
    %v322 = vunpack.c.l.b16 %v190
    %v323 = vunpack.c.l.b16 %v191
    %v324 = vunpack.c.l.b16 %v192
    %v325 = vunpack.c.l.b16 %v193
    %v326 = vunpack.c.l.b16 %v194
    %v327 = vunpack.c.l.b16 %v195
    %v328 = vunpack.c.l.b16 %v196
    %v329 = vunpack.c.l.b16 %v197
    %v330 = vunpack.c.l.b16 %v198
    %v331 = vunpack.c.l.b16 %v199
    %v332 = vunpack.c.l.b16 %v200
    %v333 = vunpack.c.l.b16 %v201
    %v334 = vunpack.c.l.b16 %v202
    %v335 = vunpack.c.l.b16 %v203
    %v336 = vunpack.c.l.b16 %v204
    %v337 = vunpack.c.l.b16 %v205
    %v338 = vunpack.c.l.b16 %v206
    %v339 = vunpack.c.l.b16 %v207
    %v340 = vunpack.c.l.b16 %v208
    %v341 = vunpack.c.l.b16 %v209
    %v342 = vunpack.c.l.b16 %v210
    %v343 = vunpack.c.l.b16 %v211
    %v344 = vunpack.c.l.b16 %v212
    %v345 = vunpack.c.l.b16 %v213
    %v346 = vunpack.c.l.b16 %v214
    %v347 = vunpack.c.l.b16 %v215
    %v348 = vunpack.c.l.b16 %v216
    %v349 = vunpack.c.l.b16 %v217
    %v350 = vunpack.c.l.b16 %v218
    %v351 = vunpack.c.l.b16 %v219
    %v352 = vunpack.c.l.b16 %v220
    %v353 = vunpack.c.l.b16 %v221
    %v354 = vunpack.c.l.b16 %v222
    %v355 = vunpack.c.l.b16 %v223
    %v356 = vunpack.c.l.b16 %v224
    %v357 = vunpack.c.l.b16 %v225
    %v358 = vunpack.c.l.b16 %v226
    %v359 = vunpack.c.l.b16 %v227
    %v360 = vunpack.c.l.b16 %v228
    %v361 = vunpack.c.l.b16 %v229
    %v362 = vunpack.c.l.b16 %v230
    %v363 = vunpack.c.l.b16 %v231
    %v364 = vunpack.c.l.b16 %v232
    %v365 = vunpack.c.l.b16 %v233
    %v366 = vunpack.c.l.b16 %v234
    %v367 = vpack.c.b16 %v304, %v303
    %v368 = vpack.c.b16 %v306, %v305
    %v369 = vpack.c.b16 %v308, %v307
    %v370 = vpack.c.b16 %v310, %v309
    %v371 = vpack.c.b16 %v312, %v311
    %v372 = vpack.c.b16 %v314, %v313
    %v373 = vpack.c.b16 %v316, %v315
    %v374 = vpack.c.b16 %v318, %v317
    %v375 = vpack.c.b16 %v320, %v319
    %v376 = vpack.c.b16 %v322, %v321
    %v377 = vpack.c.b16 %v324, %v323
    %v378 = vpack.c.b16 %v326, %v325
    %v379 = vpack.c.b16 %v328, %v327
    %v380 = vpack.c.b16 %v330, %v329
    %v381 = vpack.c.b16 %v332, %v331
    %v382 = vpack.c.b16 %v334, %v333
    %v383 = vpack.c.b16 %v336, %v335
    %v384 = vpack.c.b16 %v338, %v337
    %v385 = vpack.c.b16 %v340, %v339
    %v386 = vpack.c.b16 %v342, %v341
    %v387 = vpack.c.b16 %v344, %v343
    %v388 = vpack.c.b16 %v346, %v345
    %v389 = vpack.c.b16 %v348, %v347
    %v390 = vpack.c.b16 %v350, %v349
    %v391 = vpack.c.b16 %v352, %v351
    %v392 = vpack.c.b16 %v354, %v353
    %v393 = vpack.c.b16 %v356, %v355
    %v394 = vpack.c.b16 %v358, %v357
    %v395 = vpack.c.b16 %v360, %v359
    %v396 = vpack.c.b16 %v362, %v361
    %v397 = vpack.c.b16 %v364, %v363
    %v398 = vpack.c.b16 %v366, %v365
    %431 = vmatpush.bf16.msra.mxu0 %v374
    %432 = vmatpush.bf16.msra.mxu0 %v373
    %433 = vmatpush.bf16.msra.mxu0 %v372
    %434 = vmatpush.bf16.msra.mxu0 %v371
    %435 = vmatpush.bf16.msra.mxu0 %v370
    %436 = vmatpush.bf16.msra.mxu0 %v369
    %437 = vmatpush.bf16.msra.mxu0 %v368
    %438 = vmatpush.bf16.msra.mxu0 %v367
    %439 = vmatmul.bf16.gmra.mxu0 %v167
    %v440 = vpop.f32.mrf.mxu0
    %v441 = vadd.f32 %v237, %v440
    %v442 = vpop.f32.mrf.mxu0
    %443 = vdwg.mxu0
    %444 = vmatpush.bf16.msra.mxu0 %v382
    %445 = vmatpush.bf16.msra.mxu0 %v381
    %446 = vmatpush.bf16.msra.mxu0 %v380
    %447 = vmatpush.bf16.msra.mxu0 %v379
    %448 = vmatpush.bf16.msra.mxu0 %v378
    %449 = vmatpush.bf16.msra.mxu0 %v377
    %450 = vmatpush.bf16.msra.mxu0 %v376
    %451 = vmatpush.bf16.msra.mxu0 %v375
    %452 = vmatmul.bf16.gmra.mxu0 %v168
    %v453 = vpop.f32.mrf.mxu0
    %v454 = vadd.f32 %v441, %v453
    %v455 = vpop.f32.mrf.mxu0
    %456 = vdwg.mxu0
    %457 = vmatpush.bf16.msra.mxu0 %v390
    %458 = vmatpush.bf16.msra.mxu0 %v389
    %459 = vmatpush.bf16.msra.mxu0 %v388
    %460 = vmatpush.bf16.msra.mxu0 %v387
    %461 = vmatpush.bf16.msra.mxu0 %v386
    %462 = vmatpush.bf16.msra.mxu0 %v385
    %463 = vmatpush.bf16.msra.mxu0 %v384
    %464 = vmatpush.bf16.msra.mxu0 %v383
    %465 = vmatmul.bf16.gmra.mxu0 %v169
    %v466 = vpop.f32.mrf.mxu0
    %v467 = vadd.f32 %v454, %v466
    %v468 = vpop.f32.mrf.mxu0
    %469 = vdwg.mxu0
    %470 = vmatpush.bf16.msra.mxu0 %v398
    %471 = vmatpush.bf16.msra.mxu0 %v397
    %472 = vmatpush.bf16.msra.mxu0 %v396
    %473 = vmatpush.bf16.msra.mxu0 %v395
    %474 = vmatpush.bf16.msra.mxu0 %v394
    %475 = vmatpush.bf16.msra.mxu0 %v393
    %476 = vmatpush.bf16.msra.mxu0 %v392
    %477 = vmatpush.bf16.msra.mxu0 %v391
    %478 = vmatmul.bf16.gmra.mxu0 %v170
    %v479 = vpop.f32.mrf.mxu0
    %v480 = vadd.f32 %v467, %v479
    %v481 = vpop.f32.mrf.mxu0
    %482 = vdwg.mxu0
    %vm483 = vcmask 320512
    %484 = vst.msk [vmem:[#allocation2] sm:$0x3] %vm483, %v480
    // Predicated region
    $region22: #{tpu_custom_call.1} parent=1 // pred_check
      _
    $region23: #{tpu_custom_call.1} parent=1 // pred_check_branch
      %486 = sbr.rel (0) target = $region25
    $region24: #{tpu_custom_call.1} parent=1 // pred_region
      %488 = vsyncadd [#allocation3], 0
      %s490 = sshll.u32 [#allocation2], 4
      %s491 = int_to_ptr.vmem [resolvable:$true] %s490
      %s492 = sshll.u32 %s5, 4
      %s493 = int_to_ptr.hbm [resolvable:$true] %s492
      %495 = dma.vmem_to_hbm [thread:$0]  %s491, 32, %s493, [#allocation3]
    $region25: #{tpu_custom_call.1} parent=1 // pred_fallthru
      _
    // Predicated region
    $region26: #{tpu_custom_call.1} parent=1 // pred_check
      _
    $region27: #{tpu_custom_call.1} parent=1 // pred_check_branch
      %497 = sbr.rel (0) target = $region29
    $region28: #{tpu_custom_call.1} parent=1 // pred_region
      %499 = dma.done [#allocation3], 32
    $region29: #{tpu_custom_call.1} parent=1 // pred_fallthru
      _
    %500 = vsyncpa [#allocation3], 1

</llo_original>
